<compile_context>
chip_gen: v5e
topology: v5e:2x2
jax: 0.10.0
libtpu: 0.0.40
codegen_flags: <defaults>
</compile_context>

<pallas_src>
import jax
import jax.numpy as jnp
from jax.experimental import pallas as pl
from jax.experimental.pallas import tpu as pltpu

B, T, D, H = 2, 10, 4, 2          # batch, seq, input_size, hidden_size
F1, F2, F3, F4 = 128, 64, 32, 1   # MLP widths (fc1..fc4)


def _lstm_mlp_kernel(x_tm_ref,                    # (T*B, D)  time-major input
                     wih_t_ref, whh_t_ref, b_lstm_ref,
                     w1_t_ref, b1_ref,
                     w2_t_ref, b2_ref,
                     w3_t_ref, b3_ref,
                     w4_ref, b4_ref,
                     out_ref,
                     feat_ref):                   # VMEM scratch (B, T*H)
    x_tm = x_tm_ref[...].astype(jnp.float32)      # (T*B, D)
    wih_t = wih_t_ref[...]                        # (D, 4H)
    whh_t = whh_t_ref[...]                        # (H, 4H)
    b_lstm = b_lstm_ref[...]                      # (1, 4H)  (= b_ih + b_hh)

    # Input projection for ALL timesteps at once; bias folded in here.
    # One (T*B, D) @ (D, 4H) matmul off the serial recurrence chain.
    xg = (jnp.dot(x_tm, wih_t, preferred_element_type=jnp.float32)
          + b_lstm)                               # (T*B, 4H)

    # Hoisted recurrent-weight rows for the VPU FMAs (H = 2).
    whh0 = whh_t[0:1, :]                          # (1, 4H)
    whh1 = whh_t[1:2, :]                          # (1, 4H)

    h = jnp.zeros((B, H), jnp.float32)
    c = jnp.zeros((B, H), jnp.float32)

    # Sequential LSTM recurrence; T is small and static, so fully unrolled.
    # The only thing on the serial chain is VPU/EUP work (no MXU push/pop).
    for t in range(T):
        rec = h[:, 0:1] * whh0 + h[:, 1:2] * whh1        # (B, 4H)  == h @ W_hh^T
        gates = xg[t * B:(t + 1) * B, :] + rec           # (B, 4H), PyTorch order [i,f,g,o]
        sig = jax.nn.sigmoid(gates)                      # full-vreg EUP
        th = jnp.tanh(gates)                             # full-vreg EUP
        i_g = sig[:, 0 * H:1 * H]
        f_g = sig[:, 1 * H:2 * H]
        g_g = th[:, 2 * H:3 * H]
        o_g = sig[:, 3 * H:4 * H]
        c = f_g * c + i_g * g_g
        h = o_g * jnp.tanh(c)
        # torch.reshape((B,T,H) -> (B,T*H)): h_t lands at lanes [t*H, (t+1)*H).
        feat_ref[:, t * H:(t + 1) * H] = h

    feat = feat_ref[...]                                 # (B, T*H) = (B, 20)

    z = jnp.dot(feat, w1_t_ref[...], preferred_element_type=jnp.float32) + b1_ref[...]
    z = jnp.maximum(z, 0.0)
    z = jnp.dot(z, w2_t_ref[...], preferred_element_type=jnp.float32) + b2_ref[...]
    z = jnp.maximum(z, 0.0)
    z = jnp.dot(z, w3_t_ref[...], preferred_element_type=jnp.float32) + b3_ref[...]
    z = jnp.maximum(z, 0.0)
    # fc4 (32 -> 1): VPU multiply + lane reduction instead of a padded MXU op.
    out = jnp.sum(z * w4_ref[...], axis=-1, keepdims=True) + b4_ref[...]   # (B, 1)
    out_ref[...] = out.astype(out_ref.dtype)


def prepare_params(params):
    """One-time parameter prep (transposes, bias folding) hoisted out of forward."""
    (w_ih, w_hh, b_ih, b_hh, w1, b1, w2, b2, w3, b3, w4, b4) = params
    return (
        w_ih.T,                       # (D, 4H)
        w_hh.T,                       # (H, 4H)
        (b_ih + b_hh)[None, :],       # (1, 4H)
        w1.T, b1[None, :],            # (20, 128), (1, 128)
        w2.T, b2[None, :],            # (128, 64), (1, 64)
        w3.T, b3[None, :],            # (64, 32),  (1, 32)
        w4,   b4[None, :],            # (1, 32) kept row-shaped for the VPU fc4, (1, 1)
    )


@jax.jit
def lstm1_forward(x, prepped):
    """x: (B, T, D) float32 -> (B, 1) float32."""
    # Time-major flatten so the kernel sees contiguous (B, 4H) rows per step.
    x_tm = jnp.transpose(x, (1, 0, 2)).reshape(T * B, D)   # (T*B, D)
    args = (x_tm,) + tuple(prepped)

    vmem = pl.BlockSpec(memory_space=pltpu.MemorySpace.VMEM)
    return pl.pallas_call(
        _lstm_mlp_kernel,
        out_shape=jax.ShapeDtypeStruct((B, F4), jnp.float32),
        in_specs=[vmem] * len(args),
        out_specs=vmem,
        scratch_shapes=[pltpu.VMEM((B, T * H), jnp.float32)],
    )(*args)


def _init_params(key):
    """Deterministic init matching PyTorch default shapes (uniform +-1/sqrt(fan))."""
    ks = jax.random.split(key, 12)
    u = lambda k, shape, fan: jax.random.uniform(
        k, shape, jnp.float32, -1.0 / jnp.sqrt(fan), 1.0 / jnp.sqrt(fan))
    w_ih = u(ks[0], (4 * H, D), H)
    w_hh = u(ks[1], (4 * H, H), H)
    b_ih = u(ks[2], (4 * H,), H)
    b_hh = u(ks[3], (4 * H,), H)
    w1 = u(ks[4], (F1, T * H), T * H); b1 = u(ks[5], (F1,), T * H)
    w2 = u(ks[6], (F2, F1), F1);       b2 = u(ks[7], (F2,), F1)
    w3 = u(ks[8], (F3, F2), F2);       b3 = u(ks[9], (F3,), F2)
    w4 = u(ks[10], (F4, F3), F3);      b4 = u(ks[11], (F4,), F3)
    return (w_ih, w_hh, b_ih, b_hh, w1, b1, w2, b2, w3, b3, w4, b4)


def _reference(x, params):
    """Pure-JAX reference of the PyTorch forward (for validation)."""
    (w_ih, w_hh, b_ih, b_hh, w1, b1, w2, b2, w3, b3, w4, b4) = params
    h = jnp.zeros((x.shape[0], H), jnp.float32)
    c = jnp.zeros((x.shape[0], H), jnp.float32)
    hs = []
    for t in range(T):
        gates = x[:, t, :] @ w_ih.T + b_ih + h @ w_hh.T + b_hh
        i_g = jax.nn.sigmoid(gates[:, 0 * H:1 * H])
        f_g = jax.nn.sigmoid(gates[:, 1 * H:2 * H])
        g_g = jnp.tanh(gates[:, 2 * H:3 * H])
        o_g = jax.nn.sigmoid(gates[:, 3 * H:4 * H])
        c = f_g * c + i_g * g_g
        h = o_g * jnp.tanh(c)
        hs.append(h)
    z = jnp.concatenate(hs, axis=-1)
    z = jnp.maximum(z @ w1.T + b1, 0.0)
    z = jnp.maximum(z @ w2.T + b2, 0.0)
    z = jnp.maximum(z @ w3.T + b3, 0.0)
    return z @ w4.T + b4


if __name__ == "__main__":
    key = jax.random.PRNGKey(0)
    k_x, k_p = jax.random.split(key)
    x = jax.random.normal(k_x, (B, T, D), jnp.float32)
    params = _init_params(k_p)
    prepped = prepare_params(params)   # one-time prep, not per forward call

    out = lstm1_forward(x, prepped)
    out = jax.block_until_ready(out)

    ref = _reference(x, params)
    assert out.shape == (B, 1), out.shape
    assert jnp.allclose(out, ref, atol=1e-5, rtol=1e-5), (out, ref)
    print("KERNEL_OK")
</pallas_src>

<mosaic_0001>
module attributes {stable_mosaic.version = 11 : i64} {
  func.func @_lstm_mlp_kernel(%arg0: memref<20x4xf32, #tpu.memory_space<vmem>>, %arg1: memref<4x8xf32, #tpu.memory_space<vmem>>, %arg2: memref<2x8xf32, #tpu.memory_space<vmem>>, %arg3: memref<1x8xf32, #tpu.memory_space<vmem>>, %arg4: memref<20x128xf32, #tpu.memory_space<vmem>>, %arg5: memref<1x128xf32, #tpu.memory_space<vmem>>, %arg6: memref<128x64xf32, #tpu.memory_space<vmem>>, %arg7: memref<1x64xf32, #tpu.memory_space<vmem>>, %arg8: memref<64x32xf32, #tpu.memory_space<vmem>>, %arg9: memref<1x32xf32, #tpu.memory_space<vmem>>, %arg10: memref<1x32xf32, #tpu.memory_space<vmem>>, %arg11: memref<1x1xf32, #tpu.memory_space<vmem>>, %arg12: memref<2x1xf32, #tpu.memory_space<vmem>>, %arg13: memref<2x20xf32, #tpu.memory_space<vmem>>) attributes {dimension_semantics = [], scalar_prefetch = 0 : i64, scratch_operands = 1 : i64, tpu.core_type = #tpu.core_type<tc>} {
    %c0 = arith.constant 0 : index
    %c0_0 = arith.constant 0 : index
    %0 = vector.load %arg0[%c0, %c0_0] : memref<20x4xf32, #tpu.memory_space<vmem>>, vector<20x4xf32>
    %c0_1 = arith.constant 0 : index
    %c0_2 = arith.constant 0 : index
    %1 = vector.load %arg1[%c0_1, %c0_2] : memref<4x8xf32, #tpu.memory_space<vmem>>, vector<4x8xf32>
    %c0_3 = arith.constant 0 : index
    %c0_4 = arith.constant 0 : index
    %2 = vector.load %arg2[%c0_3, %c0_4] : memref<2x8xf32, #tpu.memory_space<vmem>>, vector<2x8xf32>
    %c0_5 = arith.constant 0 : index
    %c0_6 = arith.constant 0 : index
    %3 = vector.load %arg3[%c0_5, %c0_6] : memref<1x8xf32, #tpu.memory_space<vmem>>, vector<1x8xf32>
    %cst = arith.constant dense<0.000000e+00> : vector<20x8xf32>
    %4 = tpu.matmul %0, %1, %cst {dimension_numbers = #tpu.dot_dimension_numbers<[1], [0], [0], [1], [0, 0, 1, 1], [], []>} : vector<20x4xf32>, vector<4x8xf32>, vector<20x8xf32> -> vector<20x8xf32>
    %5 = vector.broadcast %3 : vector<1x8xf32> to vector<20x8xf32>
    %6 = arith.addf %4, %5 : vector<20x8xf32>
    %7 = vector.extract_strided_slice %2 {offsets = [0, 0], sizes = [1, 8], strides = [1, 1]} : vector<2x8xf32> to vector<1x8xf32>
    %8 = vector.extract_strided_slice %2 {offsets = [1, 0], sizes = [1, 8], strides = [1, 1]} : vector<2x8xf32> to vector<1x8xf32>
    %cst_7 = arith.constant 0.000000e+00 : f32
    %9 = vector.broadcast %cst_7 : f32 to vector<2x2xf32>
    %cst_8 = arith.constant 0.000000e+00 : f32
    %10 = vector.broadcast %cst_8 : f32 to vector<2x2xf32>
    %11 = vector.extract_strided_slice %9 {offsets = [0, 0], sizes = [2, 1], strides = [1, 1]} : vector<2x2xf32> to vector<2x1xf32>
    %12 = vector.broadcast %11 : vector<2x1xf32> to vector<2x8xf32>
    %13 = vector.broadcast %7 : vector<1x8xf32> to vector<2x8xf32>
    %14 = arith.mulf %12, %13 : vector<2x8xf32>
    %15 = vector.extract_strided_slice %9 {offsets = [0, 1], sizes = [2, 1], strides = [1, 1]} : vector<2x2xf32> to vector<2x1xf32>
    %16 = vector.broadcast %15 : vector<2x1xf32> to vector<2x8xf32>
    %17 = vector.broadcast %8 : vector<1x8xf32> to vector<2x8xf32>
    %18 = arith.mulf %16, %17 : vector<2x8xf32>
    %19 = arith.addf %14, %18 : vector<2x8xf32>
    %20 = vector.extract_strided_slice %6 {offsets = [0, 0], sizes = [2, 8], strides = [1, 1]} : vector<20x8xf32> to vector<2x8xf32>
    %21 = arith.addf %20, %19 : vector<2x8xf32>
    %22 = arith.negf %21 : vector<2x8xf32>
    %23 = math.exp %22 : vector<2x8xf32>
    %cst_9 = arith.constant 1.000000e+00 : f32
    %24 = vector.broadcast %cst_9 : f32 to vector<2x8xf32>
    %25 = arith.addf %24, %23 : vector<2x8xf32>
    %26 = arith.divf %24, %25 : vector<2x8xf32>
    %27 = math.tanh %21 : vector<2x8xf32>
    %28 = vector.extract_strided_slice %26 {offsets = [0, 0], sizes = [2, 2], strides = [1, 1]} : vector<2x8xf32> to vector<2x2xf32>
    %29 = vector.extract_strided_slice %26 {offsets = [0, 2], sizes = [2, 2], strides = [1, 1]} : vector<2x8xf32> to vector<2x2xf32>
    %30 = vector.extract_strided_slice %27 {offsets = [0, 4], sizes = [2, 2], strides = [1, 1]} : vector<2x8xf32> to vector<2x2xf32>
    %31 = vector.extract_strided_slice %26 {offsets = [0, 6], sizes = [2, 2], strides = [1, 1]} : vector<2x8xf32> to vector<2x2xf32>
    %32 = arith.mulf %29, %10 : vector<2x2xf32>
    %33 = arith.mulf %28, %30 : vector<2x2xf32>
    %34 = arith.addf %32, %33 : vector<2x2xf32>
    %35 = math.tanh %34 : vector<2x2xf32>
    %36 = arith.mulf %31, %35 : vector<2x2xf32>
    %c0_10 = arith.constant 0 : index
    %c0_11 = arith.constant 0 : index
    %37 = vector.load %arg13[%c0_10, %c0_11] : memref<2x20xf32, #tpu.memory_space<vmem>>, vector<2x2xf32>
    tpu.vector_store %arg13[%c0_10, %c0_11], %36 {strides = array<i32>} : memref<2x20xf32, #tpu.memory_space<vmem>>, vector<2x2xf32>,
    %38 = vector.extract_strided_slice %36 {offsets = [0, 0], sizes = [2, 1], strides = [1, 1]} : vector<2x2xf32> to vector<2x1xf32>
    %39 = vector.broadcast %38 : vector<2x1xf32> to vector<2x8xf32>
    %40 = vector.broadcast %7 : vector<1x8xf32> to vector<2x8xf32>
    %41 = arith.mulf %39, %40 : vector<2x8xf32>
    %42 = vector.extract_strided_slice %36 {offsets = [0, 1], sizes = [2, 1], strides = [1, 1]} : vector<2x2xf32> to vector<2x1xf32>
    %43 = vector.broadcast %42 : vector<2x1xf32> to vector<2x8xf32>
    %44 = vector.broadcast %8 : vector<1x8xf32> to vector<2x8xf32>
    %45 = arith.mulf %43, %44 : vector<2x8xf32>
    %46 = arith.addf %41, %45 : vector<2x8xf32>
    %47 = vector.extract_strided_slice %6 {offsets = [2, 0], sizes = [2, 8], strides = [1, 1]} : vector<20x8xf32> to vector<2x8xf32>
    %48 = arith.addf %47, %46 : vector<2x8xf32>
    %49 = arith.negf %48 : vector<2x8xf32>
    %50 = math.exp %49 : vector<2x8xf32>
    %cst_12 = arith.constant 1.000000e+00 : f32
    %51 = vector.broadcast %cst_12 : f32 to vector<2x8xf32>
    %52 = arith.addf %51, %50 : vector<2x8xf32>
    %53 = arith.divf %51, %52 : vector<2x8xf32>
    %54 = math.tanh %48 : vector<2x8xf32>
    %55 = vector.extract_strided_slice %53 {offsets = [0, 0], sizes = [2, 2], strides = [1, 1]} : vector<2x8xf32> to vector<2x2xf32>
    %56 = vector.extract_strided_slice %53 {offsets = [0, 2], sizes = [2, 2], strides = [1, 1]} : vector<2x8xf32> to vector<2x2xf32>
    %57 = vector.extract_strided_slice %54 {offsets = [0, 4], sizes = [2, 2], strides = [1, 1]} : vector<2x8xf32> to vector<2x2xf32>
    %58 = vector.extract_strided_slice %53 {offsets = [0, 6], sizes = [2, 2], strides = [1, 1]} : vector<2x8xf32> to vector<2x2xf32>
    %59 = arith.mulf %56, %34 : vector<2x2xf32>
    %60 = arith.mulf %55, %57 : vector<2x2xf32>
    %61 = arith.addf %59, %60 : vector<2x2xf32>
    %62 = math.tanh %61 : vector<2x2xf32>
    %63 = arith.mulf %58, %62 : vector<2x2xf32>
    %c0_13 = arith.constant 0 : index
    %c2 = arith.constant 2 : index
    %64 = vector.load %arg13[%c0_13, %c2] : memref<2x20xf32, #tpu.memory_space<vmem>>, vector<2x2xf32>
    tpu.vector_store %arg13[%c0_13, %c2], %63 {strides = array<i32>} : memref<2x20xf32, #tpu.memory_space<vmem>>, vector<2x2xf32>,
    %65 = vector.extract_strided_slice %63 {offsets = [0, 0], sizes = [2, 1], strides = [1, 1]} : vector<2x2xf32> to vector<2x1xf32>
    %66 = vector.broadcast %65 : vector<2x1xf32> to vector<2x8xf32>
    %67 = vector.broadcast %7 : vector<1x8xf32> to vector<2x8xf32>
    %68 = arith.mulf %66, %67 : vector<2x8xf32>
    %69 = vector.extract_strided_slice %63 {offsets = [0, 1], sizes = [2, 1], strides = [1, 1]} : vector<2x2xf32> to vector<2x1xf32>
    %70 = vector.broadcast %69 : vector<2x1xf32> to vector<2x8xf32>
    %71 = vector.broadcast %8 : vector<1x8xf32> to vector<2x8xf32>
    %72 = arith.mulf %70, %71 : vector<2x8xf32>
    %73 = arith.addf %68, %72 : vector<2x8xf32>
    %74 = vector.extract_strided_slice %6 {offsets = [4, 0], sizes = [2, 8], strides = [1, 1]} : vector<20x8xf32> to vector<2x8xf32>
    %75 = arith.addf %74, %73 : vector<2x8xf32>
    %76 = arith.negf %75 : vector<2x8xf32>
    %77 = math.exp %76 : vector<2x8xf32>
    %cst_14 = arith.constant 1.000000e+00 : f32
    %78 = vector.broadcast %cst_14 : f32 to vector<2x8xf32>
    %79 = arith.addf %78, %77 : vector<2x8xf32>
    %80 = arith.divf %78, %79 : vector<2x8xf32>
    %81 = math.tanh %75 : vector<2x8xf32>
    %82 = vector.extract_strided_slice %80 {offsets = [0, 0], sizes = [2, 2], strides = [1, 1]} : vector<2x8xf32> to vector<2x2xf32>
    %83 = vector.extract_strided_slice %80 {offsets = [0, 2], sizes = [2, 2], strides = [1, 1]} : vector<2x8xf32> to vector<2x2xf32>
    %84 = vector.extract_strided_slice %81 {offsets = [0, 4], sizes = [2, 2], strides = [1, 1]} : vector<2x8xf32> to vector<2x2xf32>
    %85 = vector.extract_strided_slice %80 {offsets = [0, 6], sizes = [2, 2], strides = [1, 1]} : vector<2x8xf32> to vector<2x2xf32>
    %86 = arith.mulf %83, %61 : vector<2x2xf32>
    %87 = arith.mulf %82, %84 : vector<2x2xf32>
    %88 = arith.addf %86, %87 : vector<2x2xf32>
    %89 = math.tanh %88 : vector<2x2xf32>
    %90 = arith.mulf %85, %89 : vector<2x2xf32>
    %c0_15 = arith.constant 0 : index
    %c4 = arith.constant 4 : index
    %91 = vector.load %arg13[%c0_15, %c4] : memref<2x20xf32, #tpu.memory_space<vmem>>, vector<2x2xf32>
    tpu.vector_store %arg13[%c0_15, %c4], %90 {strides = array<i32>} : memref<2x20xf32, #tpu.memory_space<vmem>>, vector<2x2xf32>,
    %92 = vector.extract_strided_slice %90 {offsets = [0, 0], sizes = [2, 1], strides = [1, 1]} : vector<2x2xf32> to vector<2x1xf32>
    %93 = vector.broadcast %92 : vector<2x1xf32> to vector<2x8xf32>
    %94 = vector.broadcast %7 : vector<1x8xf32> to vector<2x8xf32>
    %95 = arith.mulf %93, %94 : vector<2x8xf32>
    %96 = vector.extract_strided_slice %90 {offsets = [0, 1], sizes = [2, 1], strides = [1, 1]} : vector<2x2xf32> to vector<2x1xf32>
    %97 = vector.broadcast %96 : vector<2x1xf32> to vector<2x8xf32>
    %98 = vector.broadcast %8 : vector<1x8xf32> to vector<2x8xf32>
    %99 = arith.mulf %97, %98 : vector<2x8xf32>
    %100 = arith.addf %95, %99 : vector<2x8xf32>
    %101 = vector.extract_strided_slice %6 {offsets = [6, 0], sizes = [2, 8], strides = [1, 1]} : vector<20x8xf32> to vector<2x8xf32>
    %102 = arith.addf %101, %100 : vector<2x8xf32>
    %103 = arith.negf %102 : vector<2x8xf32>
    %104 = math.exp %103 : vector<2x8xf32>
    %cst_16 = arith.constant 1.000000e+00 : f32
    %105 = vector.broadcast %cst_16 : f32 to vector<2x8xf32>
    %106 = arith.addf %105, %104 : vector<2x8xf32>
    %107 = arith.divf %105, %106 : vector<2x8xf32>
    %108 = math.tanh %102 : vector<2x8xf32>
    %109 = vector.extract_strided_slice %107 {offsets = [0, 0], sizes = [2, 2], strides = [1, 1]} : vector<2x8xf32> to vector<2x2xf32>
    %110 = vector.extract_strided_slice %107 {offsets = [0, 2], sizes = [2, 2], strides = [1, 1]} : vector<2x8xf32> to vector<2x2xf32>
    %111 = vector.extract_strided_slice %108 {offsets = [0, 4], sizes = [2, 2], strides = [1, 1]} : vector<2x8xf32> to vector<2x2xf32>
    %112 = vector.extract_strided_slice %107 {offsets = [0, 6], sizes = [2, 2], strides = [1, 1]} : vector<2x8xf32> to vector<2x2xf32>
    %113 = arith.mulf %110, %88 : vector<2x2xf32>
    %114 = arith.mulf %109, %111 : vector<2x2xf32>
    %115 = arith.addf %113, %114 : vector<2x2xf32>
    %116 = math.tanh %115 : vector<2x2xf32>
    %117 = arith.mulf %112, %116 : vector<2x2xf32>
    %c0_17 = arith.constant 0 : index
    %c6 = arith.constant 6 : index
    %118 = vector.load %arg13[%c0_17, %c6] : memref<2x20xf32, #tpu.memory_space<vmem>>, vector<2x2xf32>
    tpu.vector_store %arg13[%c0_17, %c6], %117 {strides = array<i32>} : memref<2x20xf32, #tpu.memory_space<vmem>>, vector<2x2xf32>,
    %119 = vector.extract_strided_slice %117 {offsets = [0, 0], sizes = [2, 1], strides = [1, 1]} : vector<2x2xf32> to vector<2x1xf32>
    %120 = vector.broadcast %119 : vector<2x1xf32> to vector<2x8xf32>
    %121 = vector.broadcast %7 : vector<1x8xf32> to vector<2x8xf32>
    %122 = arith.mulf %120, %121 : vector<2x8xf32>
    %123 = vector.extract_strided_slice %117 {offsets = [0, 1], sizes = [2, 1], strides = [1, 1]} : vector<2x2xf32> to vector<2x1xf32>
    %124 = vector.broadcast %123 : vector<2x1xf32> to vector<2x8xf32>
    %125 = vector.broadcast %8 : vector<1x8xf32> to vector<2x8xf32>
    %126 = arith.mulf %124, %125 : vector<2x8xf32>
    %127 = arith.addf %122, %126 : vector<2x8xf32>
    %128 = vector.extract_strided_slice %6 {offsets = [8, 0], sizes = [2, 8], strides = [1, 1]} : vector<20x8xf32> to vector<2x8xf32>
    %129 = arith.addf %128, %127 : vector<2x8xf32>
    %130 = arith.negf %129 : vector<2x8xf32>
    %131 = math.exp %130 : vector<2x8xf32>
    %cst_18 = arith.constant 1.000000e+00 : f32
    %132 = vector.broadcast %cst_18 : f32 to vector<2x8xf32>
    %133 = arith.addf %132, %131 : vector<2x8xf32>
    %134 = arith.divf %132, %133 : vector<2x8xf32>
    %135 = math.tanh %129 : vector<2x8xf32>
    %136 = vector.extract_strided_slice %134 {offsets = [0, 0], sizes = [2, 2], strides = [1, 1]} : vector<2x8xf32> to vector<2x2xf32>
    %137 = vector.extract_strided_slice %134 {offsets = [0, 2], sizes = [2, 2], strides = [1, 1]} : vector<2x8xf32> to vector<2x2xf32>
    %138 = vector.extract_strided_slice %135 {offsets = [0, 4], sizes = [2, 2], strides = [1, 1]} : vector<2x8xf32> to vector<2x2xf32>
    %139 = vector.extract_strided_slice %134 {offsets = [0, 6], sizes = [2, 2], strides = [1, 1]} : vector<2x8xf32> to vector<2x2xf32>
    %140 = arith.mulf %137, %115 : vector<2x2xf32>
    %141 = arith.mulf %136, %138 : vector<2x2xf32>
    %142 = arith.addf %140, %141 : vector<2x2xf32>
    %143 = math.tanh %142 : vector<2x2xf32>
    %144 = arith.mulf %139, %143 : vector<2x2xf32>
    %c0_19 = arith.constant 0 : index
    %c8 = arith.constant 8 : index
    %145 = vector.load %arg13[%c0_19, %c8] : memref<2x20xf32, #tpu.memory_space<vmem>>, vector<2x2xf32>
    tpu.vector_store %arg13[%c0_19, %c8], %144 {strides = array<i32>} : memref<2x20xf32, #tpu.memory_space<vmem>>, vector<2x2xf32>,
    %146 = vector.extract_strided_slice %144 {offsets = [0, 0], sizes = [2, 1], strides = [1, 1]} : vector<2x2xf32> to vector<2x1xf32>
    %147 = vector.broadcast %146 : vector<2x1xf32> to vector<2x8xf32>
    %148 = vector.broadcast %7 : vector<1x8xf32> to vector<2x8xf32>
    %149 = arith.mulf %147, %148 : vector<2x8xf32>
    %150 = vector.extract_strided_slice %144 {offsets = [0, 1], sizes = [2, 1], strides = [1, 1]} : vector<2x2xf32> to vector<2x1xf32>
    %151 = vector.broadcast %150 : vector<2x1xf32> to vector<2x8xf32>
    %152 = vector.broadcast %8 : vector<1x8xf32> to vector<2x8xf32>
    %153 = arith.mulf %151, %152 : vector<2x8xf32>
    %154 = arith.addf %149, %153 : vector<2x8xf32>
    %155 = vector.extract_strided_slice %6 {offsets = [10, 0], sizes = [2, 8], strides = [1, 1]} : vector<20x8xf32> to vector<2x8xf32>
    %156 = arith.addf %155, %154 : vector<2x8xf32>
    %157 = arith.negf %156 : vector<2x8xf32>
    %158 = math.exp %157 : vector<2x8xf32>
    %cst_20 = arith.constant 1.000000e+00 : f32
    %159 = vector.broadcast %cst_20 : f32 to vector<2x8xf32>
    %160 = arith.addf %159, %158 : vector<2x8xf32>
    %161 = arith.divf %159, %160 : vector<2x8xf32>
    %162 = math.tanh %156 : vector<2x8xf32>
    %163 = vector.extract_strided_slice %161 {offsets = [0, 0], sizes = [2, 2], strides = [1, 1]} : vector<2x8xf32> to vector<2x2xf32>
    %164 = vector.extract_strided_slice %161 {offsets = [0, 2], sizes = [2, 2], strides = [1, 1]} : vector<2x8xf32> to vector<2x2xf32>
    %165 = vector.extract_strided_slice %162 {offsets = [0, 4], sizes = [2, 2], strides = [1, 1]} : vector<2x8xf32> to vector<2x2xf32>
    %166 = vector.extract_strided_slice %161 {offsets = [0, 6], sizes = [2, 2], strides = [1, 1]} : vector<2x8xf32> to vector<2x2xf32>
    %167 = arith.mulf %164, %142 : vector<2x2xf32>
    %168 = arith.mulf %163, %165 : vector<2x2xf32>
    %169 = arith.addf %167, %168 : vector<2x2xf32>
    %170 = math.tanh %169 : vector<2x2xf32>
    %171 = arith.mulf %166, %170 : vector<2x2xf32>
    %c0_21 = arith.constant 0 : index
    %c10 = arith.constant 10 : index
    %172 = vector.load %arg13[%c0_21, %c10] : memref<2x20xf32, #tpu.memory_space<vmem>>, vector<2x2xf32>
    tpu.vector_store %arg13[%c0_21, %c10], %171 {strides = array<i32>} : memref<2x20xf32, #tpu.memory_space<vmem>>, vector<2x2xf32>,
    %173 = vector.extract_strided_slice %171 {offsets = [0, 0], sizes = [2, 1], strides = [1, 1]} : vector<2x2xf32> to vector<2x1xf32>
    %174 = vector.broadcast %173 : vector<2x1xf32> to vector<2x8xf32>
    %175 = vector.broadcast %7 : vector<1x8xf32> to vector<2x8xf32>
    %176 = arith.mulf %174, %175 : vector<2x8xf32>
    %177 = vector.extract_strided_slice %171 {offsets = [0, 1], sizes = [2, 1], strides = [1, 1]} : vector<2x2xf32> to vector<2x1xf32>
    %178 = vector.broadcast %177 : vector<2x1xf32> to vector<2x8xf32>
    %179 = vector.broadcast %8 : vector<1x8xf32> to vector<2x8xf32>
    %180 = arith.mulf %178, %179 : vector<2x8xf32>
    %181 = arith.addf %176, %180 : vector<2x8xf32>
    %182 = vector.extract_strided_slice %6 {offsets = [12, 0], sizes = [2, 8], strides = [1, 1]} : vector<20x8xf32> to vector<2x8xf32>
    %183 = arith.addf %182, %181 : vector<2x8xf32>
    %184 = arith.negf %183 : vector<2x8xf32>
    %185 = math.exp %184 : vector<2x8xf32>
    %cst_22 = arith.constant 1.000000e+00 : f32
    %186 = vector.broadcast %cst_22 : f32 to vector<2x8xf32>
    %187 = arith.addf %186, %185 : vector<2x8xf32>
    %188 = arith.divf %186, %187 : vector<2x8xf32>
    %189 = math.tanh %183 : vector<2x8xf32>
    %190 = vector.extract_strided_slice %188 {offsets = [0, 0], sizes = [2, 2], strides = [1, 1]} : vector<2x8xf32> to vector<2x2xf32>
    %191 = vector.extract_strided_slice %188 {offsets = [0, 2], sizes = [2, 2], strides = [1, 1]} : vector<2x8xf32> to vector<2x2xf32>
    %192 = vector.extract_strided_slice %189 {offsets = [0, 4], sizes = [2, 2], strides = [1, 1]} : vector<2x8xf32> to vector<2x2xf32>
    %193 = vector.extract_strided_slice %188 {offsets = [0, 6], sizes = [2, 2], strides = [1, 1]} : vector<2x8xf32> to vector<2x2xf32>
    %194 = arith.mulf %191, %169 : vector<2x2xf32>
    %195 = arith.mulf %190, %192 : vector<2x2xf32>
    %196 = arith.addf %194, %195 : vector<2x2xf32>
    %197 = math.tanh %196 : vector<2x2xf32>
    %198 = arith.mulf %193, %197 : vector<2x2xf32>
    %c0_23 = arith.constant 0 : index
    %c12 = arith.constant 12 : index
    %199 = vector.load %arg13[%c0_23, %c12] : memref<2x20xf32, #tpu.memory_space<vmem>>, vector<2x2xf32>
    tpu.vector_store %arg13[%c0_23, %c12], %198 {strides = array<i32>} : memref<2x20xf32, #tpu.memory_space<vmem>>, vector<2x2xf32>,
    %200 = vector.extract_strided_slice %198 {offsets = [0, 0], sizes = [2, 1], strides = [1, 1]} : vector<2x2xf32> to vector<2x1xf32>
    %201 = vector.broadcast %200 : vector<2x1xf32> to vector<2x8xf32>
    %202 = vector.broadcast %7 : vector<1x8xf32> to vector<2x8xf32>
    %203 = arith.mulf %201, %202 : vector<2x8xf32>
    %204 = vector.extract_strided_slice %198 {offsets = [0, 1], sizes = [2, 1], strides = [1, 1]} : vector<2x2xf32> to vector<2x1xf32>
    %205 = vector.broadcast %204 : vector<2x1xf32> to vector<2x8xf32>
    %206 = vector.broadcast %8 : vector<1x8xf32> to vector<2x8xf32>
    %207 = arith.mulf %205, %206 : vector<2x8xf32>
    %208 = arith.addf %203, %207 : vector<2x8xf32>
    %209 = vector.extract_strided_slice %6 {offsets = [14, 0], sizes = [2, 8], strides = [1, 1]} : vector<20x8xf32> to vector<2x8xf32>
    %210 = arith.addf %209, %208 : vector<2x8xf32>
    %211 = arith.negf %210 : vector<2x8xf32>
    %212 = math.exp %211 : vector<2x8xf32>
    %cst_24 = arith.constant 1.000000e+00 : f32
    %213 = vector.broadcast %cst_24 : f32 to vector<2x8xf32>
    %214 = arith.addf %213, %212 : vector<2x8xf32>
    %215 = arith.divf %213, %214 : vector<2x8xf32>
    %216 = math.tanh %210 : vector<2x8xf32>
    %217 = vector.extract_strided_slice %215 {offsets = [0, 0], sizes = [2, 2], strides = [1, 1]} : vector<2x8xf32> to vector<2x2xf32>
    %218 = vector.extract_strided_slice %215 {offsets = [0, 2], sizes = [2, 2], strides = [1, 1]} : vector<2x8xf32> to vector<2x2xf32>
    %219 = vector.extract_strided_slice %216 {offsets = [0, 4], sizes = [2, 2], strides = [1, 1]} : vector<2x8xf32> to vector<2x2xf32>
    %220 = vector.extract_strided_slice %215 {offsets = [0, 6], sizes = [2, 2], strides = [1, 1]} : vector<2x8xf32> to vector<2x2xf32>
    %221 = arith.mulf %218, %196 : vector<2x2xf32>
    %222 = arith.mulf %217, %219 : vector<2x2xf32>
    %223 = arith.addf %221, %222 : vector<2x2xf32>
    %224 = math.tanh %223 : vector<2x2xf32>
    %225 = arith.mulf %220, %224 : vector<2x2xf32>
    %c0_25 = arith.constant 0 : index
    %c14 = arith.constant 14 : index
    %226 = vector.load %arg13[%c0_25, %c14] : memref<2x20xf32, #tpu.memory_space<vmem>>, vector<2x2xf32>
    tpu.vector_store %arg13[%c0_25, %c14], %225 {strides = array<i32>} : memref<2x20xf32, #tpu.memory_space<vmem>>, vector<2x2xf32>,
    %227 = vector.extract_strided_slice %225 {offsets = [0, 0], sizes = [2, 1], strides = [1, 1]} : vector<2x2xf32> to vector<2x1xf32>
    %228 = vector.broadcast %227 : vector<2x1xf32> to vector<2x8xf32>
    %229 = vector.broadcast %7 : vector<1x8xf32> to vector<2x8xf32>
    %230 = arith.mulf %228, %229 : vector<2x8xf32>
    %231 = vector.extract_strided_slice %225 {offsets = [0, 1], sizes = [2, 1], strides = [1, 1]} : vector<2x2xf32> to vector<2x1xf32>
    %232 = vector.broadcast %231 : vector<2x1xf32> to vector<2x8xf32>
    %233 = vector.broadcast %8 : vector<1x8xf32> to vector<2x8xf32>
    %234 = arith.mulf %232, %233 : vector<2x8xf32>
    %235 = arith.addf %230, %234 : vector<2x8xf32>
    %236 = vector.extract_strided_slice %6 {offsets = [16, 0], sizes = [2, 8], strides = [1, 1]} : vector<20x8xf32> to vector<2x8xf32>
    %237 = arith.addf %236, %235 : vector<2x8xf32>
    %238 = arith.negf %237 : vector<2x8xf32>
    %239 = math.exp %238 : vector<2x8xf32>
    %cst_26 = arith.constant 1.000000e+00 : f32
    %240 = vector.broadcast %cst_26 : f32 to vector<2x8xf32>
    %241 = arith.addf %240, %239 : vector<2x8xf32>
    %242 = arith.divf %240, %241 : vector<2x8xf32>
    %243 = math.tanh %237 : vector<2x8xf32>
    %244 = vector.extract_strided_slice %242 {offsets = [0, 0], sizes = [2, 2], strides = [1, 1]} : vector<2x8xf32> to vector<2x2xf32>
    %245 = vector.extract_strided_slice %242 {offsets = [0, 2], sizes = [2, 2], strides = [1, 1]} : vector<2x8xf32> to vector<2x2xf32>
    %246 = vector.extract_strided_slice %243 {offsets = [0, 4], sizes = [2, 2], strides = [1, 1]} : vector<2x8xf32> to vector<2x2xf32>
    %247 = vector.extract_strided_slice %242 {offsets = [0, 6], sizes = [2, 2], strides = [1, 1]} : vector<2x8xf32> to vector<2x2xf32>
    %248 = arith.mulf %245, %223 : vector<2x2xf32>
    %249 = arith.mulf %244, %246 : vector<2x2xf32>
    %250 = arith.addf %248, %249 : vector<2x2xf32>
    %251 = math.tanh %250 : vector<2x2xf32>
    %252 = arith.mulf %247, %251 : vector<2x2xf32>
    %c0_27 = arith.constant 0 : index
    %c16 = arith.constant 16 : index
    %253 = vector.load %arg13[%c0_27, %c16] : memref<2x20xf32, #tpu.memory_space<vmem>>, vector<2x2xf32>
    tpu.vector_store %arg13[%c0_27, %c16], %252 {strides = array<i32>} : memref<2x20xf32, #tpu.memory_space<vmem>>, vector<2x2xf32>,
    %254 = vector.extract_strided_slice %252 {offsets = [0, 0], sizes = [2, 1], strides = [1, 1]} : vector<2x2xf32> to vector<2x1xf32>
    %255 = vector.broadcast %254 : vector<2x1xf32> to vector<2x8xf32>
    %256 = vector.broadcast %7 : vector<1x8xf32> to vector<2x8xf32>
    %257 = arith.mulf %255, %256 : vector<2x8xf32>
    %258 = vector.extract_strided_slice %252 {offsets = [0, 1], sizes = [2, 1], strides = [1, 1]} : vector<2x2xf32> to vector<2x1xf32>
    %259 = vector.broadcast %258 : vector<2x1xf32> to vector<2x8xf32>
    %260 = vector.broadcast %8 : vector<1x8xf32> to vector<2x8xf32>
    %261 = arith.mulf %259, %260 : vector<2x8xf32>
    %262 = arith.addf %257, %261 : vector<2x8xf32>
    %263 = vector.extract_strided_slice %6 {offsets = [18, 0], sizes = [2, 8], strides = [1, 1]} : vector<20x8xf32> to vector<2x8xf32>
    %264 = arith.addf %263, %262 : vector<2x8xf32>
    %265 = arith.negf %264 : vector<2x8xf32>
    %266 = math.exp %265 : vector<2x8xf32>
    %cst_28 = arith.constant 1.000000e+00 : f32
    %267 = vector.broadcast %cst_28 : f32 to vector<2x8xf32>
    %268 = arith.addf %267, %266 : vector<2x8xf32>
    %269 = arith.divf %267, %268 : vector<2x8xf32>
    %270 = math.tanh %264 : vector<2x8xf32>
    %271 = vector.extract_strided_slice %269 {offsets = [0, 0], sizes = [2, 2], strides = [1, 1]} : vector<2x8xf32> to vector<2x2xf32>
    %272 = vector.extract_strided_slice %269 {offsets = [0, 2], sizes = [2, 2], strides = [1, 1]} : vector<2x8xf32> to vector<2x2xf32>
    %273 = vector.extract_strided_slice %270 {offsets = [0, 4], sizes = [2, 2], strides = [1, 1]} : vector<2x8xf32> to vector<2x2xf32>
    %274 = vector.extract_strided_slice %269 {offsets = [0, 6], sizes = [2, 2], strides = [1, 1]} : vector<2x8xf32> to vector<2x2xf32>
    %275 = arith.mulf %272, %250 : vector<2x2xf32>
    %276 = arith.mulf %271, %273 : vector<2x2xf32>
    %277 = arith.addf %275, %276 : vector<2x2xf32>
    %278 = math.tanh %277 : vector<2x2xf32>
    %279 = arith.mulf %274, %278 : vector<2x2xf32>
    %c0_29 = arith.constant 0 : index
    %c18 = arith.constant 18 : index
    %280 = vector.load %arg13[%c0_29, %c18] : memref<2x20xf32, #tpu.memory_space<vmem>>, vector<2x2xf32>
    tpu.vector_store %arg13[%c0_29, %c18], %279 {strides = array<i32>} : memref<2x20xf32, #tpu.memory_space<vmem>>, vector<2x2xf32>,
    %c0_30 = arith.constant 0 : index
    %c0_31 = arith.constant 0 : index
    %281 = vector.load %arg13[%c0_30, %c0_31] : memref<2x20xf32, #tpu.memory_space<vmem>>, vector<2x20xf32>
    %c0_32 = arith.constant 0 : index
    %c0_33 = arith.constant 0 : index
    %282 = vector.load %arg4[%c0_32, %c0_33] : memref<20x128xf32, #tpu.memory_space<vmem>>, vector<20x128xf32>
    %cst_34 = arith.constant dense<0.000000e+00> : vector<2x128xf32>
    %283 = tpu.matmul %281, %282, %cst_34 {dimension_numbers = #tpu.dot_dimension_numbers<[1], [0], [0], [1], [0, 0, 1, 1], [], []>} : vector<2x20xf32>, vector<20x128xf32>, vector<2x128xf32> -> vector<2x128xf32>
    %c0_35 = arith.constant 0 : index
    %c0_36 = arith.constant 0 : index
    %284 = vector.load %arg5[%c0_35, %c0_36] : memref<1x128xf32, #tpu.memory_space<vmem>>, vector<1x128xf32>
    %285 = vector.broadcast %284 : vector<1x128xf32> to vector<2x128xf32>
    %286 = arith.addf %283, %285 : vector<2x128xf32>
    %cst_37 = arith.constant 0.000000e+00 : f32
    %287 = vector.broadcast %cst_37 : f32 to vector<2x128xf32>
    %288 = arith.maximumf %286, %287 : vector<2x128xf32>
    %c0_38 = arith.constant 0 : index
    %c0_39 = arith.constant 0 : index
    %289 = vector.load %arg6[%c0_38, %c0_39] : memref<128x64xf32, #tpu.memory_space<vmem>>, vector<128x64xf32>
    %cst_40 = arith.constant dense<0.000000e+00> : vector<2x64xf32>
    %290 = tpu.matmul %288, %289, %cst_40 {dimension_numbers = #tpu.dot_dimension_numbers<[1], [0], [0], [1], [0, 0, 1, 1], [], []>} : vector<2x128xf32>, vector<128x64xf32>, vector<2x64xf32> -> vector<2x64xf32>
    %c0_41 = arith.constant 0 : index
    %c0_42 = arith.constant 0 : index
    %291 = vector.load %arg7[%c0_41, %c0_42] : memref<1x64xf32, #tpu.memory_space<vmem>>, vector<1x64xf32>
    %292 = vector.broadcast %291 : vector<1x64xf32> to vector<2x64xf32>
    %293 = arith.addf %290, %292 : vector<2x64xf32>
    %cst_43 = arith.constant 0.000000e+00 : f32
    %294 = vector.broadcast %cst_43 : f32 to vector<2x64xf32>
    %295 = arith.maximumf %293, %294 : vector<2x64xf32>
    %c0_44 = arith.constant 0 : index
    %c0_45 = arith.constant 0 : index
    %296 = vector.load %arg8[%c0_44, %c0_45] : memref<64x32xf32, #tpu.memory_space<vmem>>, vector<64x32xf32>
    %cst_46 = arith.constant dense<0.000000e+00> : vector<2x32xf32>
    %297 = tpu.matmul %295, %296, %cst_46 {dimension_numbers = #tpu.dot_dimension_numbers<[1], [0], [0], [1], [0, 0, 1, 1], [], []>} : vector<2x64xf32>, vector<64x32xf32>, vector<2x32xf32> -> vector<2x32xf32>
    %c0_47 = arith.constant 0 : index
    %c0_48 = arith.constant 0 : index
    %298 = vector.load %arg9[%c0_47, %c0_48] : memref<1x32xf32, #tpu.memory_space<vmem>>, vector<1x32xf32>
    %299 = vector.broadcast %298 : vector<1x32xf32> to vector<2x32xf32>
    %300 = arith.addf %297, %299 : vector<2x32xf32>
    %cst_49 = arith.constant 0.000000e+00 : f32
    %301 = vector.broadcast %cst_49 : f32 to vector<2x32xf32>
    %302 = arith.maximumf %300, %301 : vector<2x32xf32>
    %c0_50 = arith.constant 0 : index
    %c0_51 = arith.constant 0 : index
    %303 = vector.load %arg10[%c0_50, %c0_51] : memref<1x32xf32, #tpu.memory_space<vmem>>, vector<1x32xf32>
    %304 = vector.broadcast %303 : vector<1x32xf32> to vector<2x32xf32>
    %305 = arith.mulf %302, %304 : vector<2x32xf32>
    %cst_52 = arith.constant dense<0.000000e+00> : vector<2xf32>
    %306 = vector.multi_reduction <add>, %305, %cst_52 [1] : vector<2x32xf32> to vector<2xf32>
    %307 = vector.shape_cast %306 : vector<2xf32> to vector<2x1xf32>
    %c0_53 = arith.constant 0 : index
    %c0_54 = arith.constant 0 : index
    %308 = vector.load %arg11[%c0_53, %c0_54] : memref<1x1xf32, #tpu.memory_space<vmem>>, vector<1x1xf32>
    %309 = vector.broadcast %308 : vector<1x1xf32> to vector<2x1xf32>
    %310 = arith.addf %307, %309 : vector<2x1xf32>
    %c0_55 = arith.constant 0 : index
    %c0_56 = arith.constant 0 : index
    %311 = vector.load %arg12[%c0_55, %c0_56] : memref<2x1xf32, #tpu.memory_space<vmem>>, vector<2x1xf32>
    tpu.vector_store %arg12[%c0_55, %c0_56], %310 {strides = array<i32>} : memref<2x1xf32, #tpu.memory_space<vmem>>, vector<2x1xf32>,
    return
  }
}

</mosaic_0001>

<llo_original>
// kernel: lstm1_forward.1
$region0: #{lstm1_forward.1}
  #allocation0 [shape = 'u32[]', space=smem, size = 0x4, offset = 0x4, fixed_abs, tag = 'smem constant byte address 0x4 - core index']
  #allocation1 [shape = 'u32[72,128]{1,0:T(1,128)}', space=vmem, size = 0x9000, scoped, tag = 'internal scratch']
  #allocation2 [shape = 'f32[2,20]{1,0:T(2,128)}', space=vmem, size = 0x400, scoped, tag = 'scratch operand']
  #allocation3 [shape = 'f32[1,1]{1,0:T(1,128)S(1)}', space=vmem, size = 0x200, scoped, tag = 'scoped memory for lstm1_forward.1']
  %s0 = inlined_call_operand.vmem [shape: f32[20,4], index: 0, kind: input, shape index: {}]
  %s1 = inlined_call_operand.vmem [shape: f32[4,8], index: 1, kind: input, shape index: {}]
  %s2 = inlined_call_operand.vmem [shape: f32[2,8], index: 2, kind: input, shape index: {}]
  %s3 = inlined_call_operand.vmem [shape: f32[1,8], index: 3, kind: input, shape index: {}]
  %s4 = inlined_call_operand.vmem [shape: f32[20,128], index: 4, kind: input, shape index: {}]
  %s5 = inlined_call_operand.vmem [shape: f32[1,128], index: 5, kind: input, shape index: {}]
  %s6 = inlined_call_operand.vmem [shape: f32[128,64], index: 6, kind: input, shape index: {}]
  %s7 = inlined_call_operand.vmem [shape: f32[1,64], index: 7, kind: input, shape index: {}]
  %s8 = inlined_call_operand.vmem [shape: f32[64,32], index: 8, kind: input, shape index: {}]
  %s9 = inlined_call_operand.vmem [shape: f32[1,32], index: 9, kind: input, shape index: {}]
  %s10 = inlined_call_operand.vmem [shape: f32[1,32], index: 10, kind: input, shape index: {}]
  %s11 = inlined_call_operand.<no memory space> [shape: f32[1,1], index: 11, kind: input, shape index: {}]
  %s12 = inlined_call_operand.vmem [shape: f32[2,1], index: 12, kind: output, shape index: {}]
  %s13 = sld [smem:[#allocation0]]
  $region58: #{lstm1_forward.1} parent=0
    _
  %s15 = ssub.s32 1, %s13
  %s16 = scalar_select 0, %s15, %s13
  %v17 = vstv %s11
  %18 = vst [vmem:[#allocation3] sm:$0x1] %v17
  // Predicated region
  $region2: #{lstm1_forward.1} parent=0 // pred_check
    _
  $region3: #{lstm1_forward.1} parent=0 // pred_check_branch
    %20 = sbr.rel (0) target = $region5
  $region4: #{lstm1_forward.1} parent=0 // pred_region
    _
  $region5: #{lstm1_forward.1} parent=0 // pred_fallthru
    _
  // Predicated region
  $region6: #{lstm1_forward.1} parent=0 // pred_check
    _
  $region7: #{lstm1_forward.1} parent=0 // pred_check_branch
    %22 = sbr.rel (0) target = $region9
  $region8: #{lstm1_forward.1} parent=0 // pred_region
    _
  $region9: #{lstm1_forward.1} parent=0 // pred_fallthru
    _
  // Predicated region
  $region10: #{lstm1_forward.1} parent=0 // pred_check
    _
  $region11: #{lstm1_forward.1} parent=0 // pred_check_branch
    %24 = sbr.rel (0) target = $region13
  $region12: #{lstm1_forward.1} parent=0 // pred_region
    _
  $region13: #{lstm1_forward.1} parent=0 // pred_fallthru
    _
  // Predicated region
  $region14: #{lstm1_forward.1} parent=0 // pred_check
    _
  $region15: #{lstm1_forward.1} parent=0 // pred_check_branch
    %26 = sbr.rel (0) target = $region17
  $region16: #{lstm1_forward.1} parent=0 // pred_region
    _
  $region17: #{lstm1_forward.1} parent=0 // pred_fallthru
    _
  // Predicated region
  $region18: #{lstm1_forward.1} parent=0 // pred_check
    _
  $region19: #{lstm1_forward.1} parent=0 // pred_check_branch
    %28 = sbr.rel (0) target = $region21
  $region20: #{lstm1_forward.1} parent=0 // pred_region
    _
  $region21: #{lstm1_forward.1} parent=0 // pred_fallthru
    _
  // Predicated region
  $region22: #{lstm1_forward.1} parent=0 // pred_check
    _
  $region23: #{lstm1_forward.1} parent=0 // pred_check_branch
    %30 = sbr.rel (0) target = $region25
  $region24: #{lstm1_forward.1} parent=0 // pred_region
    _
  $region25: #{lstm1_forward.1} parent=0 // pred_fallthru
    _
  // Predicated region
  $region26: #{lstm1_forward.1} parent=0 // pred_check
    _
  $region27: #{lstm1_forward.1} parent=0 // pred_check_branch
    %32 = sbr.rel (0) target = $region29
  $region28: #{lstm1_forward.1} parent=0 // pred_region
    _
  $region29: #{lstm1_forward.1} parent=0 // pred_fallthru
    _
  // Predicated region
  $region30: #{lstm1_forward.1} parent=0 // pred_check
    _
  $region31: #{lstm1_forward.1} parent=0 // pred_check_branch
    %34 = sbr.rel (0) target = $region33
  $region32: #{lstm1_forward.1} parent=0 // pred_region
    _
  $region33: #{lstm1_forward.1} parent=0 // pred_fallthru
    _
  // Predicated region
  $region34: #{lstm1_forward.1} parent=0 // pred_check
    _
  $region35: #{lstm1_forward.1} parent=0 // pred_check_branch
    %36 = sbr.rel (0) target = $region37
  $region36: #{lstm1_forward.1} parent=0 // pred_region
    _
  $region37: #{lstm1_forward.1} parent=0 // pred_fallthru
    _
  // Predicated region
  $region38: #{lstm1_forward.1} parent=0 // pred_check
    _
  $region39: #{lstm1_forward.1} parent=0 // pred_check_branch
    %38 = sbr.rel (0) target = $region41
  $region40: #{lstm1_forward.1} parent=0 // pred_region
    _
  $region41: #{lstm1_forward.1} parent=0 // pred_fallthru
    _
  // Predicated region
  $region42: #{lstm1_forward.1} parent=0 // pred_check
    _
  $region43: #{lstm1_forward.1} parent=0 // pred_check_branch
    %40 = sbr.rel (0) target = $region45
  $region44: #{lstm1_forward.1} parent=0 // pred_region
    _
  $region45: #{lstm1_forward.1} parent=0 // pred_fallthru
    _
  // Predicated region
  $region46: #{lstm1_forward.1} parent=0 // pred_check
    _
  $region47: #{lstm1_forward.1} parent=0 // pred_check_branch
    %42 = sbr.rel (0) target = $region49
  $region48: #{lstm1_forward.1} parent=0 // pred_region
    _
  $region49: #{lstm1_forward.1} parent=0 // pred_fallthru
    _
  %v43 = vld [vmem:[%s0] sm:$0xff]
  %v44 = vld [vmem:[%s0 + $0x8] sm:$0xff]
  %v45 = vld [vmem:[%s0 + $0x10] sm:$0xf]
  %v46 = vld [vmem:[%s1] sm:$0xf]
  %v47 = vld [vmem:[%s2] sm:$0x3]
  %v48 = vld [vmem:[%s3] sm:$0x1]
  %v50 = vperm.slane %v48, 0
  %vm52 = vcmask 31744
  %v54 = vsel %vm52, %v43, 0
  %v57 = vsel %vm52, %v44, 0
  %v60 = vsel %vm52, %v45, 0
  %vm62 = vcmask 1043456
  %v64 = vsel %vm62, %v46, 0
  %66 = vmatpush.msra.mxu0 0.0
  %67 = vmatpush.msra.mxu0 0.0
  %68 = vmatpush.msra.mxu0 0.0
  %69 = vmatpush.msra.mxu0 0.0
  %70 = vmatpush.msra.mxu0 0.0
  %71 = vmatpush.msra.mxu0 0.0
  %72 = vmatpush.msra.mxu0 0.0
  %73 = vmatpush.msra.mxu0 0.0
  %74 = vmatpush.msra.mxu0 0.0
  %75 = vmatpush.msra.mxu0 0.0
  %76 = vmatpush.msra.mxu0 0.0
  %77 = vmatpush.msra.mxu0 0.0
  %78 = vmatpush.msra.mxu0 0.0
  %79 = vmatpush.msra.mxu0 0.0
  %80 = vmatpush.msra.mxu0 0.0
  %81 = vmatpush.msra.mxu0 %v64
  %82 = vmatmul.f32.gmra.mxu0 %v54
  %v83 = vpop.f32.mrf.mxu0
  %v84 = vadd.f32 %v50, %v83
  %85 = vmatmul.f32.gmra.mxu0 %v57
  %v86 = vpop.f32.mrf.mxu0
  %v87 = vadd.f32 %v50, %v86
  %88 = vmatmul.f32.gmra.mxu0 %v60
  %v89 = vpop.f32.mrf.mxu0
  %v90 = vadd.f32 %v50, %v89
  %91 = vdwg.mxu0
  %v92 = vperm.slane %v47, 0
  %v93 = vmul.f32 %v92, 0.0
  %v94 = vperm.slane %v47, 1
  %v95 = vmul.f32 %v94, 0.0
  %v96 = vadd.f32 %v93, %v95
  %v97 = vadd.f32 %v84, %v96
  %v98 = vxor.u32 %v97, 2147483648
  %v99 = vmul.f32 %v98, 1.442695
  %v100 = vpow.pop %v99
  %v101 = vadd.f32 %v100, 1.0
  %v102 = vrcp.pop %v101
  %v103 = vmul.f32 %v101, %v102
  %v104 = vsub.f32 1.0, %v103
  %v105 = vmul.f32 %v102, %v104
  %v106 = vadd.f32 %v102, %v105
  %vm107 = vweird.f32 %v101
  %vm108 = vweird.f32 %v102
  %vm109 = vmor %vm107, %vm108
  %v110 = vsel %vm109, %v102, %v106
  %v111 = vand.u32 2147483647, %v101
  %vm112 = vcmp.eq.f32.partialorder %v111, 8.507059e+37
  %v113 = vand.u32 %v101, 2147483648
  %v114 = vor.u32 1.1754944e-38, %v113
  %v115 = vsel %vm112, %v114, %v110
  %v116 = vmul.f32 1.0, %v115
  %v117 = vtanh.pop %v97
  %v118 = vmul.f32 %v116, 0.0
  %120 = vrot.lane.b32.xlu0 %v117, 124
  %v121 = vpop.permute.xlu0 %120
  %v123 = vmul.f32 %v116, %v121
  %125 = vrot.lane.b32.xlu0 %v123, 2
  %v126 = vpop.permute.xlu0 %125
  %v128 = vadd.f32 %v118, %v126
  %v129 = vtanh.pop %v128
  %131 = vrot.lane.b32.xlu0 %v129, 4
  %v132 = vpop.permute.xlu0 %131
  %v134 = vmul.f32 %v116, %v132
  %136 = vrot.lane.b32.xlu0 %v134, 122
  %v137 = vpop.permute.xlu0 %136
  %vm139 = vcmask 9216
  %140 = vst.msk [vmem:[#allocation2] sm:$0x3] %vm139, %v137
  %141 = vset.pattern.permute.xlu0 6
  %142 = vperm.xlu0 %141, %v134
  %v143 = vpop.permute.xlu0 %142
  %v145 = vmul.f32 %v143, %v92
  %146 = vset.pattern.permute.xlu0 7
  %147 = vperm.xlu0 %146, %v134
  %v148 = vpop.permute.xlu0 %147
  %v150 = vmul.f32 %v148, %v94
  %v151 = vadd.f32 %v145, %v150
  %v153 = vrot.slane %v151, 6
  %v155 = vadd.f32 %v84, %v153
  %v156 = vxor.u32 %v155, 2147483648
  %v157 = vmul.f32 %v156, 1.442695
  %v158 = vpow.pop %v157
  %v159 = vadd.f32 %v158, 1.0
  %v160 = vrcp.pop %v159
  %v161 = vmul.f32 %v159, %v160
  %v162 = vsub.f32 1.0, %v161
  %v163 = vmul.f32 %v160, %v162
  %v164 = vadd.f32 %v160, %v163
  %vm165 = vweird.f32 %v159
  %vm166 = vweird.f32 %v160
  %vm167 = vmor %vm165, %vm166
  %v168 = vsel %vm167, %v160, %v164
  %v169 = vand.u32 2147483647, %v159
  %vm170 = vcmp.eq.f32.partialorder %v169, 8.507059e+37
  %v171 = vand.u32 %v159, 2147483648
  %v172 = vor.u32 1.1754944e-38, %v171
  %v173 = vsel %vm170, %v172, %v168
  %v174 = vmul.f32 1.0, %v173
  %v175 = vtanh.pop %v155
  %v177 = vrot.slane %v128, 6
  %v179 = vmul.f32 %v174, %v177
  %181 = vrot.lane.b32.xlu0 %v175, 124
  %v182 = vpop.permute.xlu0 %181
  %v184 = vmul.f32 %v174, %v182
  %186 = vrot.lane.b32.xlu0 %v184, 2
  %v187 = vpop.permute.xlu0 %186
  %v189 = vadd.f32 %v179, %v187
  %v190 = vtanh.pop %v189
  %192 = vrot.lane.b32.xlu0 %v190, 4
  %v193 = vpop.permute.xlu0 %192
  %v195 = vmul.f32 %v174, %v193
  %197 = vrot.lane.b32.xlu0 %v195, 124
  %v198 = vpop.permute.xlu0 %197
  %vm200 = vcmask 27666
  %201 = vst.msk [vmem:[#allocation2 - $0x2] sm:$0xc] %vm200, %v198
  %202 = vset.pattern.permute.xlu0 6
  %203 = vperm.xlu0 %202, %v195
  %v204 = vpop.permute.xlu0 %203
  %v206 = vmul.f32 %v204, %v92
  %207 = vset.pattern.permute.xlu0 7
  %208 = vperm.xlu0 %207, %v195
  %v209 = vpop.permute.xlu0 %208
  %v211 = vmul.f32 %v209, %v94
  %v212 = vadd.f32 %v206, %v211
  %v214 = vrot.slane %v212, 6
  %v216 = vadd.f32 %v84, %v214
  %v217 = vxor.u32 %v216, 2147483648
  %v218 = vmul.f32 %v217, 1.442695
  %v219 = vpow.pop %v218
  %v220 = vadd.f32 %v219, 1.0
  %v221 = vrcp.pop %v220
  %v222 = vmul.f32 %v220, %v221
  %v223 = vsub.f32 1.0, %v222
  %v224 = vmul.f32 %v221, %v223
  %v225 = vadd.f32 %v221, %v224
  %vm226 = vweird.f32 %v220
  %vm227 = vweird.f32 %v221
  %vm228 = vmor %vm226, %vm227
  %v229 = vsel %vm228, %v221, %v225
  %v230 = vand.u32 2147483647, %v220
  %vm231 = vcmp.eq.f32.partialorder %v230, 8.507059e+37
  %v232 = vand.u32 %v220, 2147483648
  %v233 = vor.u32 1.1754944e-38, %v232
  %v234 = vsel %vm231, %v233, %v229
  %v235 = vmul.f32 1.0, %v234
  %v236 = vtanh.pop %v216
  %v238 = vrot.slane %v189, 6
  %v240 = vmul.f32 %v235, %v238
  %242 = vrot.lane.b32.xlu0 %v236, 124
  %v243 = vpop.permute.xlu0 %242
  %v245 = vmul.f32 %v235, %v243
  %247 = vrot.lane.b32.xlu0 %v245, 2
  %v248 = vpop.permute.xlu0 %247
  %v250 = vadd.f32 %v240, %v248
  %v251 = vtanh.pop %v250
  %253 = vrot.lane.b32.xlu0 %v251, 4
  %v254 = vpop.permute.xlu0 %253
  %v256 = vmul.f32 %v235, %v254
  %258 = vrot.lane.b32.xlu0 %v256, 126
  %v259 = vpop.permute.xlu0 %258
  %vm261 = vcmask 46116
  %262 = vst.msk [vmem:[#allocation2 - $0x4] sm:$0x30] %vm261, %v259
  %263 = vset.pattern.permute.xlu0 6
  %264 = vperm.xlu0 %263, %v256
  %v265 = vpop.permute.xlu0 %264
  %v267 = vmul.f32 %v265, %v92
  %268 = vset.pattern.permute.xlu0 7
  %269 = vperm.xlu0 %268, %v256
  %v270 = vpop.permute.xlu0 %269
  %v272 = vmul.f32 %v270, %v94
  %v273 = vadd.f32 %v267, %v272
  %v275 = vrot.slane %v273, 6
  %v277 = vadd.f32 %v84, %v275
  %v278 = vxor.u32 %v277, 2147483648
  %v279 = vmul.f32 %v278, 1.442695
  %v280 = vpow.pop %v279
  %v281 = vadd.f32 %v280, 1.0
  %v282 = vrcp.pop %v281
  %v283 = vmul.f32 %v281, %v282
  %v284 = vsub.f32 1.0, %v283
  %v285 = vmul.f32 %v282, %v284
  %v286 = vadd.f32 %v282, %v285
  %vm287 = vweird.f32 %v281
  %vm288 = vweird.f32 %v282
  %vm289 = vmor %vm287, %vm288
  %v290 = vsel %vm289, %v282, %v286
  %v291 = vand.u32 2147483647, %v281
  %vm292 = vcmp.eq.f32.partialorder %v291, 8.507059e+37
  %v293 = vand.u32 %v281, 2147483648
  %v294 = vor.u32 1.1754944e-38, %v293
  %v295 = vsel %vm292, %v294, %v290
  %v296 = vmul.f32 1.0, %v295
  %v297 = vtanh.pop %v277
  %v299 = vrot.slane %v250, 6
  %v301 = vmul.f32 %v296, %v299
  %303 = vrot.lane.b32.xlu0 %v297, 124
  %v304 = vpop.permute.xlu0 %303
  %v306 = vmul.f32 %v296, %v304
  %308 = vrot.lane.b32.xlu0 %v306, 2
  %v309 = vpop.permute.xlu0 %308
  %v311 = vadd.f32 %v301, %v309
  %v312 = vtanh.pop %v311
  %314 = vrot.lane.b32.xlu0 %v312, 4
  %v315 = vpop.permute.xlu0 %314
  %v317 = vmul.f32 %v296, %v315
  %vm318 = vcmask 64566
  %319 = vst.msk [vmem:[#allocation2 - $0x6] sm:$0xc0] %vm318, %v317
  %321 = vset.pattern.permute.xlu0 6
  %322 = vperm.xlu0 %321, %v317
  %v323 = vpop.permute.xlu0 %322
  %v325 = vmul.f32 %v323, %v92
  %326 = vset.pattern.permute.xlu0 7
  %327 = vperm.xlu0 %326, %v317
  %v328 = vpop.permute.xlu0 %327
  %v330 = vmul.f32 %v328, %v94
  %v331 = vadd.f32 %v325, %v330
  %v333 = vrot.slane %v331, 6
  %v335 = vadd.f32 %v87, %v333
  %v336 = vxor.u32 %v335, 2147483648
  %v337 = vmul.f32 %v336, 1.442695
  %v338 = vpow.pop %v337
  %v339 = vadd.f32 %v338, 1.0
  %v340 = vrcp.pop %v339
  %v341 = vmul.f32 %v339, %v340
  %v342 = vsub.f32 1.0, %v341
  %v343 = vmul.f32 %v340, %v342
  %v344 = vadd.f32 %v340, %v343
  %vm345 = vweird.f32 %v339
  %vm346 = vweird.f32 %v340
  %vm347 = vmor %vm345, %vm346
  %v348 = vsel %vm347, %v340, %v344
  %v349 = vand.u32 2147483647, %v339
  %vm350 = vcmp.eq.f32.partialorder %v349, 8.507059e+37
  %v351 = vand.u32 %v339, 2147483648
  %v352 = vor.u32 1.1754944e-38, %v351
  %v353 = vsel %vm350, %v352, %v348
  %v354 = vmul.f32 1.0, %v353
  %v355 = vtanh.pop %v335
  %v357 = vrot.slane %v311, 6
  %v359 = vmul.f32 %v354, %v357
  %361 = vrot.lane.b32.xlu0 %v355, 124
  %v362 = vpop.permute.xlu0 %361
  %v364 = vmul.f32 %v354, %v362
  %366 = vrot.lane.b32.xlu0 %v364, 2
  %v367 = vpop.permute.xlu0 %366
  %v369 = vadd.f32 %v359, %v367
  %v370 = vtanh.pop %v369
  %372 = vrot.lane.b32.xlu0 %v370, 4
  %v373 = vpop.permute.xlu0 %372
  %v375 = vmul.f32 %v354, %v373
  %377 = vrot.lane.b32.xlu0 %v375, 2
  %v378 = vpop.permute.xlu0 %377
  %vm380 = vcmask 74816
  %381 = vst.msk [vmem:[#allocation2] sm:$0x3] %vm380, %v378
  %382 = vset.pattern.permute.xlu0 6
  %383 = vperm.xlu0 %382, %v375
  %v384 = vpop.permute.xlu0 %383
  %v386 = vmul.f32 %v384, %v92
  %387 = vset.pattern.permute.xlu0 7
  %388 = vperm.xlu0 %387, %v375
  %v389 = vpop.permute.xlu0 %388
  %v391 = vmul.f32 %v389, %v94
  %v392 = vadd.f32 %v386, %v391
  %v394 = vrot.slane %v392, 6
  %v396 = vadd.f32 %v87, %v394
  %v397 = vxor.u32 %v396, 2147483648
  %v398 = vmul.f32 %v397, 1.442695
  %v399 = vpow.pop %v398
  %v400 = vadd.f32 %v399, 1.0
  %v401 = vrcp.pop %v400
  %v402 = vmul.f32 %v400, %v401
  %v403 = vsub.f32 1.0, %v402
  %v404 = vmul.f32 %v401, %v403
  %v405 = vadd.f32 %v401, %v404
  %vm406 = vweird.f32 %v400
  %vm407 = vweird.f32 %v401
  %vm408 = vmor %vm406, %vm407
  %v409 = vsel %vm408, %v401, %v405
  %v410 = vand.u32 2147483647, %v400
  %vm411 = vcmp.eq.f32.partialorder %v410, 8.507059e+37
  %v412 = vand.u32 %v400, 2147483648
  %v413 = vor.u32 1.1754944e-38, %v412
  %v414 = vsel %vm411, %v413, %v409
  %v415 = vmul.f32 1.0, %v414
  %v416 = vtanh.pop %v396
  %v418 = vrot.slane %v369, 6
  %v420 = vmul.f32 %v415, %v418
  %422 = vrot.lane.b32.xlu0 %v416, 124
  %v423 = vpop.permute.xlu0 %422
  %v425 = vmul.f32 %v415, %v423
  %427 = vrot.lane.b32.xlu0 %v425, 2
  %v428 = vpop.permute.xlu0 %427
  %v430 = vadd.f32 %v420, %v428
  %v431 = vtanh.pop %v430
  %433 = vrot.lane.b32.xlu0 %v431, 4
  %v434 = vpop.permute.xlu0 %433
  %v436 = vmul.f32 %v415, %v434
  %438 = vrot.lane.b32.xlu0 %v436, 4
  %v439 = vpop.permute.xlu0 %438
  %vm441 = vcmask 93266
  %442 = vst.msk [vmem:[#allocation2 - $0x2] sm:$0xc] %vm441, %v439
  %443 = vset.pattern.permute.xlu0 6
  %444 = vperm.xlu0 %443, %v436
  %v445 = vpop.permute.xlu0 %444
  %v447 = vmul.f32 %v445, %v92
  %448 = vset.pattern.permute.xlu0 7
  %449 = vperm.xlu0 %448, %v436
  %v450 = vpop.permute.xlu0 %449
  %v452 = vmul.f32 %v450, %v94
  %v453 = vadd.f32 %v447, %v452
  %v455 = vrot.slane %v453, 6
  %v457 = vadd.f32 %v87, %v455
  %v458 = vxor.u32 %v457, 2147483648
  %v459 = vmul.f32 %v458, 1.442695
  %v460 = vpow.pop %v459
  %v461 = vadd.f32 %v460, 1.0
  %v462 = vrcp.pop %v461
  %v463 = vmul.f32 %v461, %v462
  %v464 = vsub.f32 1.0, %v463
  %v465 = vmul.f32 %v462, %v464
  %v466 = vadd.f32 %v462, %v465
  %vm467 = vweird.f32 %v461
  %vm468 = vweird.f32 %v462
  %vm469 = vmor %vm467, %vm468
  %v470 = vsel %vm469, %v462, %v466
  %v471 = vand.u32 2147483647, %v461
  %vm472 = vcmp.eq.f32.partialorder %v471, 8.507059e+37
  %v473 = vand.u32 %v461, 2147483648
  %v474 = vor.u32 1.1754944e-38, %v473
  %v475 = vsel %vm472, %v474, %v470
  %v476 = vmul.f32 1.0, %v475
  %v477 = vtanh.pop %v457
  %v479 = vrot.slane %v430, 6
  %v481 = vmul.f32 %v476, %v479
  %483 = vrot.lane.b32.xlu0 %v477, 124
  %v484 = vpop.permute.xlu0 %483
  %v486 = vmul.f32 %v476, %v484
  %488 = vrot.lane.b32.xlu0 %v486, 2
  %v489 = vpop.permute.xlu0 %488
  %v491 = vadd.f32 %v481, %v489
  %v492 = vtanh.pop %v491
  %494 = vrot.lane.b32.xlu0 %v492, 4
  %v495 = vpop.permute.xlu0 %494
  %v497 = vmul.f32 %v476, %v495
  %499 = vrot.lane.b32.xlu0 %v497, 6
  %v500 = vpop.permute.xlu0 %499
  %vm502 = vcmask 111716
  %503 = vst.msk [vmem:[#allocation2 - $0x4] sm:$0x30] %vm502, %v500
  %504 = vset.pattern.permute.xlu0 6
  %505 = vperm.xlu0 %504, %v497
  %v506 = vpop.permute.xlu0 %505
  %v508 = vmul.f32 %v506, %v92
  %509 = vset.pattern.permute.xlu0 7
  %510 = vperm.xlu0 %509, %v497
  %v511 = vpop.permute.xlu0 %510
  %v513 = vmul.f32 %v511, %v94
  %v514 = vadd.f32 %v508, %v513
  %v516 = vrot.slane %v514, 6
  %v518 = vadd.f32 %v87, %v516
  %v519 = vxor.u32 %v518, 2147483648
  %v520 = vmul.f32 %v519, 1.442695
  %v521 = vpow.pop %v520
  %v522 = vadd.f32 %v521, 1.0
  %v523 = vrcp.pop %v522
  %v524 = vmul.f32 %v522, %v523
  %v525 = vsub.f32 1.0, %v524
  %v526 = vmul.f32 %v523, %v525
  %v527 = vadd.f32 %v523, %v526
  %vm528 = vweird.f32 %v522
  %vm529 = vweird.f32 %v523
  %vm530 = vmor %vm528, %vm529
  %v531 = vsel %vm530, %v523, %v527
  %v532 = vand.u32 2147483647, %v522
  %vm533 = vcmp.eq.f32.partialorder %v532, 8.507059e+37
  %v534 = vand.u32 %v522, 2147483648
  %v535 = vor.u32 1.1754944e-38, %v534
  %v536 = vsel %vm533, %v535, %v531
  %v537 = vmul.f32 1.0, %v536
  %v538 = vtanh.pop %v518
  %v540 = vrot.slane %v491, 6
  %v542 = vmul.f32 %v537, %v540
  %544 = vrot.lane.b32.xlu0 %v538, 124
  %v545 = vpop.permute.xlu0 %544
  %v547 = vmul.f32 %v537, %v545
  %549 = vrot.lane.b32.xlu0 %v547, 2
  %v550 = vpop.permute.xlu0 %549
  %v552 = vadd.f32 %v542, %v550
  %v553 = vtanh.pop %v552
  %555 = vrot.lane.b32.xlu0 %v553, 4
  %v556 = vpop.permute.xlu0 %555
  %v558 = vmul.f32 %v537, %v556
  %560 = vrot.lane.b32.xlu0 %v558, 8
  %v561 = vpop.permute.xlu0 %560
  %vm563 = vcmask 130166
  %564 = vst.msk [vmem:[#allocation2 - $0x6] sm:$0xc0] %vm563, %v561
  %565 = vset.pattern.permute.xlu0 6
  %566 = vperm.xlu0 %565, %v558
  %v567 = vpop.permute.xlu0 %566
  %v569 = vmul.f32 %v567, %v92
  %570 = vset.pattern.permute.xlu0 7
  %571 = vperm.xlu0 %570, %v558
  %v572 = vpop.permute.xlu0 %571
  %v574 = vmul.f32 %v572, %v94
  %v575 = vadd.f32 %v569, %v574
  %v577 = vrot.slane %v575, 6
  %v579 = vadd.f32 %v90, %v577
  %v580 = vxor.u32 %v579, 2147483648
  %v581 = vmul.f32 %v580, 1.442695
  %v582 = vpow.pop %v581
  %v583 = vadd.f32 %v582, 1.0
  %v584 = vrcp.pop %v583
  %v585 = vmul.f32 %v583, %v584
  %v586 = vsub.f32 1.0, %v585
  %v587 = vmul.f32 %v584, %v586
  %v588 = vadd.f32 %v584, %v587
  %vm589 = vweird.f32 %v583
  %vm590 = vweird.f32 %v584
  %vm591 = vmor %vm589, %vm590
  %v592 = vsel %vm591, %v584, %v588
  %v593 = vand.u32 2147483647, %v583
  %vm594 = vcmp.eq.f32.partialorder %v593, 8.507059e+37
  %v595 = vand.u32 %v583, 2147483648
  %v596 = vor.u32 1.1754944e-38, %v595
  %v597 = vsel %vm594, %v596, %v592
  %v598 = vmul.f32 1.0, %v597
  %v599 = vtanh.pop %v579
  %v601 = vrot.slane %v552, 6
  %v603 = vmul.f32 %v598, %v601
  %605 = vrot.lane.b32.xlu0 %v599, 124
  %v606 = vpop.permute.xlu0 %605
  %v608 = vmul.f32 %v598, %v606
  %610 = vrot.lane.b32.xlu0 %v608, 2
  %v611 = vpop.permute.xlu0 %610
  %v613 = vadd.f32 %v603, %v611
  %v614 = vtanh.pop %v613
  %616 = vrot.lane.b32.xlu0 %v614, 4
  %v617 = vpop.permute.xlu0 %616
  %v619 = vmul.f32 %v598, %v617
  %621 = vrot.lane.b32.xlu0 %v619, 10
  %v622 = vpop.permute.xlu0 %621
  %vm624 = vcmask 140416
  %625 = vst.msk [vmem:[#allocation2] sm:$0x3] %vm624, %v622
  %626 = vset.pattern.permute.xlu0 6
  %627 = vperm.xlu0 %626, %v619
  %v628 = vpop.permute.xlu0 %627
  %v630 = vmul.f32 %v628, %v92
  %631 = vset.pattern.permute.xlu0 7
  %632 = vperm.xlu0 %631, %v619
  %v633 = vpop.permute.xlu0 %632
  %v635 = vmul.f32 %v633, %v94
  %v636 = vadd.f32 %v630, %v635
  %v638 = vrot.slane %v636, 6
  %v640 = vadd.f32 %v90, %v638
  %v641 = vxor.u32 %v640, 2147483648
  %v642 = vmul.f32 %v641, 1.442695
  %v643 = vpow.pop %v642
  %v644 = vadd.f32 %v643, 1.0
  %v645 = vrcp.pop %v644
  %v646 = vmul.f32 %v644, %v645
  %v647 = vsub.f32 1.0, %v646
  %v648 = vmul.f32 %v645, %v647
  %v649 = vadd.f32 %v645, %v648
  %vm650 = vweird.f32 %v644
  %vm651 = vweird.f32 %v645
  %vm652 = vmor %vm650, %vm651
  %v653 = vsel %vm652, %v645, %v649
  %v654 = vand.u32 2147483647, %v644
  %vm655 = vcmp.eq.f32.partialorder %v654, 8.507059e+37
  %v656 = vand.u32 %v644, 2147483648
  %v657 = vor.u32 1.1754944e-38, %v656
  %v658 = vsel %vm655, %v657, %v653
  %v659 = vmul.f32 1.0, %v658
  %v660 = vtanh.pop %v640
  %v662 = vrot.slane %v613, 6
  %v664 = vmul.f32 %v659, %v662
  %666 = vrot.lane.b32.xlu0 %v660, 124
  %v667 = vpop.permute.xlu0 %666
  %v669 = vmul.f32 %v659, %v667
  %671 = vrot.lane.b32.xlu0 %v669, 2
  %v672 = vpop.permute.xlu0 %671
  %v674 = vadd.f32 %v664, %v672
  %v675 = vtanh.pop %v674
  %677 = vrot.lane.b32.xlu0 %v675, 4
  %v678 = vpop.permute.xlu0 %677
  %v680 = vmul.f32 %v659, %v678
  %682 = vrot.lane.b32.xlu0 %v680, 12
  %v683 = vpop.permute.xlu0 %682
  %vm685 = vcmask 158866
  %686 = vst.msk [vmem:[#allocation2 - $0x2] sm:$0xc] %vm685, %v683
  %v687 = vld [vmem:[#allocation2] sm:$0x3]
  %v688 = vld [vmem:[%s4] sm:$0xff]
  %v689 = vld [vmem:[%s4 + $0x8] sm:$0xff]
  %v690 = vld [vmem:[%s4 + $0x10] sm:$0xf]
  %v691 = vld [vmem:[%s5] sm:$0x1]
  %v693 = vperm.slane %v691, 0
  %vm695 = vcmask 162816
  %v697 = vsel %vm695, %v687, 0
  %v700 = vsel %vm62, %v690, 0
  %702 = vmatpush.msra.mxu0 0.0
  %703 = vmatpush.msra.mxu0 0.0
  %704 = vmatpush.msra.mxu0 0.0
  %705 = vmatpush.msra.mxu0 0.0
  %706 = vmatpush.msra.mxu0 0.0
  %707 = vmatpush.msra.mxu0 0.0
  %708 = vmatpush.msra.mxu0 0.0
  %709 = vmatpush.msra.mxu0 0.0
  %710 = vmatpush.msra.mxu0 0.0
  %711 = vmatpush.msra.mxu0 0.0
  %712 = vmatpush.msra.mxu0 0.0
  %713 = vmatpush.msra.mxu0 0.0
  %714 = vmatpush.msra.mxu0 0.0
  %715 = vmatpush.msra.mxu0 %v700
  %716 = vmatpush.msra.mxu0 %v689
  %717 = vmatpush.msra.mxu0 %v688
  %718 = vmatmul.f32.gmra.mxu0 %v697
  %v719 = vpop.f32.mrf.mxu0
  %v720 = vadd.f32 %v693, %v719
  %721 = vdwg.mxu0
  %v722 = vmax.f32 %v720, 0.0
  %v723 = vld [vmem:[%s6] sm:$0xff]
  %v724 = vld [vmem:[%s6 + $0x8] sm:$0xff]
  %v725 = vld [vmem:[%s6 + $0x10] sm:$0xff]
  %v726 = vld [vmem:[%s6 + $0x18] sm:$0xff]
  %v727 = vld [vmem:[%s6 + $0x20] sm:$0xff]
  %v728 = vld [vmem:[%s6 + $0x28] sm:$0xff]
  %v729 = vld [vmem:[%s6 + $0x30] sm:$0xff]
  %v730 = vld [vmem:[%s6 + $0x38] sm:$0xff]
  %v731 = vld [vmem:[%s6 + $0x40] sm:$0xff]
  %v732 = vld [vmem:[%s6 + $0x48] sm:$0xff]
  %v733 = vld [vmem:[%s6 + $0x50] sm:$0xff]
  %v734 = vld [vmem:[%s6 + $0x58] sm:$0xff]
  %v735 = vld [vmem:[%s6 + $0x60] sm:$0xff]
  %v736 = vld [vmem:[%s6 + $0x68] sm:$0xff]
  %v737 = vld [vmem:[%s6 + $0x70] sm:$0xff]
  %v738 = vld [vmem:[%s6 + $0x78] sm:$0xff]
  %v739 = vld [vmem:[%s7] sm:$0x1]
  %v741 = vperm.slane %v739, 0
  %743 = vmatpush.msra.mxu0 %v738
  %744 = vmatpush.msra.mxu0 %v737
  %745 = vmatpush.msra.mxu0 %v736
  %746 = vmatpush.msra.mxu0 %v735
  %747 = vmatpush.msra.mxu0 %v734
  %748 = vmatpush.msra.mxu0 %v733
  %749 = vmatpush.msra.mxu0 %v732
  %750 = vmatpush.msra.mxu0 %v731
  %751 = vmatpush.msra.mxu0 %v730
  %752 = vmatpush.msra.mxu0 %v729
  %753 = vmatpush.msra.mxu0 %v728
  %754 = vmatpush.msra.mxu0 %v727
  %755 = vmatpush.msra.mxu0 %v726
  %756 = vmatpush.msra.mxu0 %v725
  %757 = vmatpush.msra.mxu0 %v724
  %758 = vmatpush.msra.mxu0 %v723
  %759 = vmatmul.f32.gmra.mxu0 %v722
  %v760 = vpop.f32.mrf.mxu0
  %v761 = vadd.f32 %v741, %v760
  %762 = vdwg.mxu0
  %v763 = vmax.f32 %v761, 0.0
  %v764 = vld [vmem:[%s8] sm:$0xff]
  %v765 = vld [vmem:[%s8 + $0x8] sm:$0xff]
  %v766 = vld [vmem:[%s8 + $0x10] sm:$0xff]
  %v767 = vld [vmem:[%s8 + $0x18] sm:$0xff]
  %v768 = vld [vmem:[%s8 + $0x20] sm:$0xff]
  %v769 = vld [vmem:[%s8 + $0x28] sm:$0xff]
  %v770 = vld [vmem:[%s8 + $0x30] sm:$0xff]
  %v771 = vld [vmem:[%s8 + $0x38] sm:$0xff]
  %v772 = vld [vmem:[%s9] sm:$0x1]
  %v774 = vperm.slane %v772, 0
  %vm776 = vcmask 523264
  %v778 = vsel %vm776, %v763, 0
  %780 = vmatpush.msra.mxu0 0.0
  %781 = vmatpush.msra.mxu0 0.0
  %782 = vmatpush.msra.mxu0 0.0
  %783 = vmatpush.msra.mxu0 0.0
  %784 = vmatpush.msra.mxu0 0.0
  %785 = vmatpush.msra.mxu0 0.0
  %786 = vmatpush.msra.mxu0 0.0
  %787 = vmatpush.msra.mxu0 0.0
  %788 = vmatpush.msra.mxu0 %v771
  %789 = vmatpush.msra.mxu0 %v770
  %790 = vmatpush.msra.mxu0 %v769
  %791 = vmatpush.msra.mxu0 %v768
  %792 = vmatpush.msra.mxu0 %v767
  %793 = vmatpush.msra.mxu0 %v766
  %794 = vmatpush.msra.mxu0 %v765
  %795 = vmatpush.msra.mxu0 %v764
  %796 = vmatmul.f32.gmra.mxu0 %v778
  %v797 = vpop.f32.mrf.mxu0
  %v798 = vadd.f32 %v774, %v797
  %799 = vdwg.mxu0
  %v800 = vmax.f32 %v798, 0.0
  %v801 = vld [vmem:[%s10] sm:$0x1]
  %v803 = vperm.slane %v801, 0
  %v805 = vmul.f32 %v800, %v803
  %vm806 = vcmask 254976
  %v807 = vsel %vm806, %v805, 0.0
  %808 = vadd.xlane.f32.xlu0 %v807
  %v809 = vpop.xlane.xlu0 %808
  %v810 = vld [vmem:[#allocation3] sm:$0x1]
  %v812 = vperm.slane %v810, 0
  %v814 = vadd.f32 %v809, %v812
  %vm815 = vcmask 1024
  %816 = vst.msk [vmem:[%s12] sm:$0x3] %vm815, %v814
  // Predicated region
  $region50: #{lstm1_forward.1} parent=0 // pred_check
    _
  $region51: #{lstm1_forward.1} parent=0 // pred_check_branch
    %818 = sbr.rel (0) target = $region53
  $region52: #{lstm1_forward.1} parent=0 // pred_region
    _
  $region53: #{lstm1_forward.1} parent=0 // pred_fallthru
    _
  // Predicated region
  $region54: #{lstm1_forward.1} parent=0 // pred_check
    _
  $region55: #{lstm1_forward.1} parent=0 // pred_check_branch
    %820 = sbr.rel (0) target = $region57
  $region56: #{lstm1_forward.1} parent=0 // pred_region
    _
  $region57: #{lstm1_forward.1} parent=0 // pred_fallthru
    _

</llo_original>
